<compile_context>
chip_gen: v6e
topology: v6e:2x2x1
jax: 0.10.0
libtpu: 0.0.40
codegen_flags: <defaults>
</compile_context>

<pallas_src>
import jax
import jax.numpy as jnp
from jax.experimental import pallas as pl
from jax.experimental.pallas import tpu as pltpu


def _round_up(x, m):
    return ((x + m - 1) // m) * m


def _dva_kernel(x_ref, w0_ref, w1_ref, b1_ref, w2_ref, b2_ref, out_ref):
    # x_ref : (TB, K0)    [s | a | 1]
    # w0_ref: (K0, 2E)    [[Ws1; Wa1; bs1+ba1] | [Ws2; Wa2; bs2+ba2]]
    # w1_ref: (2E, 2H)    block-diagonal [w1_1, 0; 0, w1_2]
    # b1_ref: (1, 2H)     [b1_1 | b1_2]
    # w2_ref: (1, 2H)     [w2_1^T | w2_2^T]
    # b2_ref: (1, 2)      [b2_1 | b2_2]
    # out_ref:(TB, 2)     [v1 | v2]
    emb = jnp.dot(x_ref[...], w0_ref[...],
                  preferred_element_type=jnp.float32)            # (TB, 2E)
    h = jnp.dot(jnp.maximum(emb, 0.0), w1_ref[...],
                preferred_element_type=jnp.float32) + b1_ref[...]  # (TB, 2H)
    p = jnp.maximum(h, 0.0) * w2_ref[...]                          # VPU mul
    hdim = p.shape[1] // 2
    v1 = jnp.sum(p[:, :hdim], axis=-1, keepdims=True)              # XLU reduce
    v2 = jnp.sum(p[:, hdim:], axis=-1, keepdims=True)
    out = jnp.concatenate([v1, v2], axis=-1) + b2_ref[...]         # (TB, 2)
    out_ref[...] = out.astype(out_ref.dtype)


def pack_params(params1, params2, *, partial=False, partial_idx=None,
                action_dim=None):
    """Pack the two branches' Linear weights into fused kernel operands.

    params{1,2} = (Ws, bs, Wa, ba, W_hidden, b_hidden, W_out, b_out) with
    weights in (in, out) layout and biases as (1, out).
    """
    ws1, bs1, wa1, ba1, w11, b11, w21, b21 = params1
    ws2, bs2, wa2, ba2, w12, b12, w22, b22 = params2
    E = ws1.shape[1]
    H = w11.shape[1]

    if partial:
        # Fold a[:, partial_idx] into the action-embed weight: scatter-add the
        # rows of Wa to the selected positions of a full (action_dim, E) weight.
        idx = jnp.asarray(partial_idx, dtype=jnp.int32)
        wa1 = jnp.zeros((action_dim, E), wa1.dtype).at[idx].add(wa1)
        wa2 = jnp.zeros((action_dim, E), wa2.dtype).at[idx].add(wa2)

    # Embedding weight with the bias folded as the last row (ones column input).
    w0_1 = jnp.concatenate([ws1, wa1, bs1 + ba1], axis=0)   # (S+A+1, E)
    w0_2 = jnp.concatenate([ws2, wa2, bs2 + ba2], axis=0)
    W0 = jnp.concatenate([w0_1, w0_2], axis=1)               # (S+A+1, 2E)

    # Block-diagonal hidden weight.
    Z = jnp.zeros((E, H), w11.dtype)
    W1 = jnp.concatenate(
        [jnp.concatenate([w11, Z], axis=1),
         jnp.concatenate([Z, w12], axis=1)], axis=0)          # (2E, 2H)
    B1 = jnp.concatenate([b11, b12], axis=1)                  # (1, 2H)

    # Final layer: row vector for VPU multiply + lane reduce; scalar biases.
    W2 = jnp.concatenate([w21.T, w22.T], axis=1)              # (1, 2H)
    B2 = jnp.concatenate([b21, b22], axis=1)                  # (1, 2)
    return W0, W1, B1, W2, B2


def double_value_add(s, a, packed, *, block_b=512):
    """Fused DoubleValueAdd forward. Returns (x1, x2), each (B, 1) f32."""
    W0, W1, B1, W2, B2 = packed
    B = s.shape[0]
    ones = jnp.ones((B, 1), s.dtype)
    x = jnp.concatenate([s, a, ones], axis=1)        # (B, K0)
    K0 = x.shape[1]
    twoE = W0.shape[1]
    twoH = W1.shape[1]

    # Batch tile: multiple of 8 (f32 sublane), capped at block_b.
    TB = block_b if B > block_b else _round_up(B, 8)
    Bp = _round_up(B, TB)
    if Bp != B:
        x = jnp.pad(x, ((0, Bp - B), (0, 0)))

    out = pl.pallas_call(
        _dva_kernel,
        out_shape=jax.ShapeDtypeStruct((Bp, 2), jnp.float32),
        grid_spec=pltpu.PrefetchScalarGridSpec(
            num_scalar_prefetch=0,
            grid=(Bp // TB,),
            in_specs=[
                pl.BlockSpec((TB, K0), lambda i: (i, 0)),     # activations: tiled
                pl.BlockSpec((K0, twoE), lambda i: (0, 0)),   # weights: resident
                pl.BlockSpec((twoE, twoH), lambda i: (0, 0)),
                pl.BlockSpec((1, twoH), lambda i: (0, 0)),
                pl.BlockSpec((1, twoH), lambda i: (0, 0)),
                pl.BlockSpec((1, 2), lambda i: (0, 0)),
            ],
            out_specs=pl.BlockSpec((TB, 2), lambda i: (i, 0)),
        ),
        compiler_params=pltpu.CompilerParams(
            dimension_semantics=("parallel",)),
    )(x, W0, W1, B1, W2, B2)

    out = out[:B]
    return out[:, 0:1], out[:, 1:2]


def _init_linear(key, in_dim, out_dim):
    """Deterministic nn.Linear-style init, weight stored as (in, out)."""
    kw, kb = jax.random.split(key)
    bound = 1.0 / jnp.sqrt(jnp.float32(in_dim))
    w = jax.random.uniform(kw, (in_dim, out_dim), jnp.float32, -bound, bound)
    b = jax.random.uniform(kb, (1, out_dim), jnp.float32, -bound, bound)
    return w, b


def make_params(key, state_dim, action_dim, embed_dim, hidden_dim):
    keys = jax.random.split(key, 4)
    ws, bs = _init_linear(keys[0], state_dim, embed_dim)    # state_embed
    wa, ba = _init_linear(keys[1], action_dim, embed_dim)   # action_embed
    w1, b1 = _init_linear(keys[2], embed_dim, hidden_dim)   # affines[0]
    w2, b2 = _init_linear(keys[3], hidden_dim, 1)           # affines[1]
    return (ws, bs, wa, ba, w1, b1, w2, b2)


if __name__ == "__main__":
    # Small shapes consistent with the module (hidden_layer=1, partial=False).
    B, state_dim, action_dim, embed_dim, hidden_dim = 8, 32, 8, 32, 128

    key = jax.random.PRNGKey(0)
    ks, ka, kp1, kp2 = jax.random.split(key, 4)

    s = jax.random.normal(ks, (B, state_dim), jnp.float32)
    a = jax.random.normal(ka, (B, action_dim), jnp.float32)

    params1 = make_params(kp1, state_dim, action_dim, embed_dim, hidden_dim)
    params2 = make_params(kp2, state_dim, action_dim, embed_dim, hidden_dim)

    packed = pack_params(params1, params2)
    x1, x2 = double_value_add(s, a, packed)
    jax.block_until_ready((x1, x2))

    # Pure-JAX reference check against the unfused per-branch math.
    def ref_branch(s, a, p):
        ws, bs, wa, ba, w1, b1, w2, b2 = p
        x = (s @ ws + bs) + (a @ wa + ba)
        x = jnp.maximum(x, 0.0) @ w1 + b1
        x = jnp.maximum(x, 0.0) @ w2 + b2
        return x

    r1 = ref_branch(s, a, params1)
    r2 = ref_branch(s, a, params2)
    assert x1.shape == (B, 1) and x2.shape == (B, 1)
    assert jnp.allclose(x1, r1, atol=1e-4, rtol=1e-4)
    assert jnp.allclose(x2, r2, atol=1e-4, rtol=1e-4)

    # TODO(synk): optional bf16 cast of activations/weights for v6e large-batch
    # throughput (keep f32 accumulation) is not enabled by default.
    print("KERNEL_OK")
</pallas_src>

<mosaic_0001>
module attributes {stable_mosaic.version = 11 : i64} {
  func.func @_dva_kernel(%arg0: i32, %arg1: memref<8x41xf32, #tpu.memory_space<vmem>>, %arg2: memref<41x64xf32, #tpu.memory_space<vmem>>, %arg3: memref<64x256xf32, #tpu.memory_space<vmem>>, %arg4: memref<1x256xf32, #tpu.memory_space<vmem>>, %arg5: memref<1x256xf32, #tpu.memory_space<vmem>>, %arg6: memref<1x2xf32, #tpu.memory_space<vmem>>, %arg7: memref<8x2xf32, #tpu.memory_space<vmem>>) attributes {dimension_semantics = [#tpu.dimension_semantics<parallel>], iteration_bounds = array<i64: 1>, scalar_prefetch = 0 : i64, scratch_operands = 0 : i64, tpu.core_type = #tpu.core_type<tc>, window_params = [{transform_indices = @transform_0, window_bounds = array<i64: 8, 41>}, {pipeline_mode = #tpu.pipeline_mode<synchronous>, transform_indices = @transform_1, window_bounds = array<i64: 41, 64>}, {pipeline_mode = #tpu.pipeline_mode<synchronous>, transform_indices = @transform_2, window_bounds = array<i64: 64, 256>}, {pipeline_mode = #tpu.pipeline_mode<synchronous>, transform_indices = @transform_3, window_bounds = array<i64: 1, 256>}, {pipeline_mode = #tpu.pipeline_mode<synchronous>, transform_indices = @transform_4, window_bounds = array<i64: 1, 256>}, {pipeline_mode = #tpu.pipeline_mode<synchronous>, transform_indices = @transform_5, window_bounds = array<i64: 1, 2>}, {transform_indices = @transform_6, window_bounds = array<i64: 8, 2>}]} {
    %c0 = arith.constant 0 : index
    %c0_0 = arith.constant 0 : index
    %0 = vector.load %arg1[%c0, %c0_0] : memref<8x41xf32, #tpu.memory_space<vmem>>, vector<8x41xf32>
    %c0_1 = arith.constant 0 : index
    %c0_2 = arith.constant 0 : index
    %1 = vector.load %arg2[%c0_1, %c0_2] : memref<41x64xf32, #tpu.memory_space<vmem>>, vector<41x64xf32>
    %cst = arith.constant dense<0.000000e+00> : vector<8x64xf32>
    %2 = tpu.matmul %0, %1, %cst {dimension_numbers = #tpu.dot_dimension_numbers<[1], [0], [0], [1], [0, 0, 1, 1], [], []>} : vector<8x41xf32>, vector<41x64xf32>, vector<8x64xf32> -> vector<8x64xf32>
    %cst_3 = arith.constant 0.000000e+00 : f32
    %3 = vector.broadcast %cst_3 : f32 to vector<8x64xf32>
    %4 = arith.maximumf %2, %3 : vector<8x64xf32>
    %c0_4 = arith.constant 0 : index
    %c0_5 = arith.constant 0 : index
    %5 = vector.load %arg3[%c0_4, %c0_5] : memref<64x256xf32, #tpu.memory_space<vmem>>, vector<64x256xf32>
    %cst_6 = arith.constant dense<0.000000e+00> : vector<8x256xf32>
    %6 = tpu.matmul %4, %5, %cst_6 {dimension_numbers = #tpu.dot_dimension_numbers<[1], [0], [0], [1], [0, 0, 1, 1], [], []>} : vector<8x64xf32>, vector<64x256xf32>, vector<8x256xf32> -> vector<8x256xf32>
    %c0_7 = arith.constant 0 : index
    %c0_8 = arith.constant 0 : index
    %7 = vector.load %arg4[%c0_7, %c0_8] : memref<1x256xf32, #tpu.memory_space<vmem>>, vector<1x256xf32>
    %8 = vector.broadcast %7 : vector<1x256xf32> to vector<8x256xf32>
    %9 = arith.addf %6, %8 : vector<8x256xf32>
    %cst_9 = arith.constant 0.000000e+00 : f32
    %10 = vector.broadcast %cst_9 : f32 to vector<8x256xf32>
    %11 = arith.maximumf %9, %10 : vector<8x256xf32>
    %c0_10 = arith.constant 0 : index
    %c0_11 = arith.constant 0 : index
    %12 = vector.load %arg5[%c0_10, %c0_11] : memref<1x256xf32, #tpu.memory_space<vmem>>, vector<1x256xf32>
    %13 = vector.broadcast %12 : vector<1x256xf32> to vector<8x256xf32>
    %14 = arith.mulf %11, %13 : vector<8x256xf32>
    %15 = vector.extract_strided_slice %14 {offsets = [0, 0], sizes = [8, 128], strides = [1, 1]} : vector<8x256xf32> to vector<8x128xf32>
    %cst_12 = arith.constant dense<0.000000e+00> : vector<8xf32>
    %16 = vector.multi_reduction <add>, %15, %cst_12 [1] : vector<8x128xf32> to vector<8xf32>
    %17 = vector.shape_cast %16 : vector<8xf32> to vector<8x1xf32>
    %18 = vector.extract_strided_slice %14 {offsets = [0, 128], sizes = [8, 128], strides = [1, 1]} : vector<8x256xf32> to vector<8x128xf32>
    %cst_13 = arith.constant dense<0.000000e+00> : vector<8xf32>
    %19 = vector.multi_reduction <add>, %18, %cst_13 [1] : vector<8x128xf32> to vector<8xf32>
    %20 = vector.shape_cast %19 : vector<8xf32> to vector<8x1xf32>
    %21 = tpu.concatenate %17, %20 in 1 : vector<8x1xf32>, vector<8x1xf32> -> vector<8x2xf32>
    %c0_14 = arith.constant 0 : index
    %c0_15 = arith.constant 0 : index
    %22 = vector.load %arg6[%c0_14, %c0_15] : memref<1x2xf32, #tpu.memory_space<vmem>>, vector<1x2xf32>
    %23 = vector.broadcast %22 : vector<1x2xf32> to vector<8x2xf32>
    %24 = arith.addf %21, %23 : vector<8x2xf32>
    %c0_16 = arith.constant 0 : index
    %c0_17 = arith.constant 0 : index
    %25 = vector.load %arg7[%c0_16, %c0_17] : memref<8x2xf32, #tpu.memory_space<vmem>>, vector<8x2xf32>
    tpu.vector_store %arg7[%c0_16, %c0_17], %24 {strides = array<i32>} : memref<8x2xf32, #tpu.memory_space<vmem>>, vector<8x2xf32>,
    return
  }
  func.func @transform_0(%arg0: i32) -> (i32, i32) {
    %c0_i32 = arith.constant 0 : i32
    %c0_i32_0 = arith.constant 0 : i32
    return %arg0, %c0_i32 : i32, i32
  }
  func.func @transform_1(%arg0: i32) -> (i32, i32) {
    %c0_i32 = arith.constant 0 : i32
    %c0_i32_0 = arith.constant 0 : i32
    %c0_i32_1 = arith.constant 0 : i32
    return %c0_i32, %c0_i32_0 : i32, i32
  }
  func.func @transform_2(%arg0: i32) -> (i32, i32) {
    %c0_i32 = arith.constant 0 : i32
    %c0_i32_0 = arith.constant 0 : i32
    %c0_i32_1 = arith.constant 0 : i32
    return %c0_i32, %c0_i32_0 : i32, i32
  }
  func.func @transform_3(%arg0: i32) -> (i32, i32) {
    %c0_i32 = arith.constant 0 : i32
    %c0_i32_0 = arith.constant 0 : i32
    %c0_i32_1 = arith.constant 0 : i32
    return %c0_i32, %c0_i32_0 : i32, i32
  }
  func.func @transform_4(%arg0: i32) -> (i32, i32) {
    %c0_i32 = arith.constant 0 : i32
    %c0_i32_0 = arith.constant 0 : i32
    %c0_i32_1 = arith.constant 0 : i32
    return %c0_i32, %c0_i32_0 : i32, i32
  }
  func.func @transform_5(%arg0: i32) -> (i32, i32) {
    %c0_i32 = arith.constant 0 : i32
    %c0_i32_0 = arith.constant 0 : i32
    %c0_i32_1 = arith.constant 0 : i32
    return %c0_i32, %c0_i32_0 : i32, i32
  }
  func.func @transform_6(%arg0: i32) -> (i32, i32) {
    %c0_i32 = arith.constant 0 : i32
    %c0_i32_0 = arith.constant 0 : i32
    return %arg0, %c0_i32 : i32, i32
  }
}

</mosaic_0001>

<llo_original>
// kernel: tpu_custom_call.1
$region0: #{tpu_custom_call.1}
  #allocation0 [shape = 'u32[]', space=smem, size = 0x4, offset = 0x4, fixed_abs, tag = 'smem constant byte address 0x4 - core index']
  #allocation1 [shape = 'u32[144,128]{1,0:T(1,128)}', space=vmem, size = 0x12000, scoped, tag = 'internal scratch']
  %s0 = inlined_call_operand.hbm [shape: f32[8,41], index: 0, kind: input, shape index: {}]
  %s1 = inlined_call_operand.hbm [shape: f32[41,64], index: 1, kind: input, shape index: {}]
  %s2 = inlined_call_operand.hbm [shape: f32[64,256], index: 2, kind: input, shape index: {}]
  %s3 = inlined_call_operand.vmem [shape: f32[1,256], index: 3, kind: input, shape index: {}]
  %s4 = inlined_call_operand.vmem [shape: f32[1,256], index: 4, kind: input, shape index: {}]
  %s5 = inlined_call_operand.vmem [shape: f32[1,2], index: 5, kind: input, shape index: {}]
  %s6 = inlined_call_operand.vmem [shape: f32[8,2], index: 6, kind: output, shape index: {}]
  %s7 = sld [smem:[#allocation0]]
  $region46: #{tpu_custom_call.1} parent=0
    _
  %s9 = ssub.s32 1, %s7
  %s10 = scalar_select 0, %s9, %s7
  $region1: #{tpu_custom_call.1} parent=0
    #allocation2 [shape = 'u8[4096]{0}', space=vmem, size = 0x1000, scoped, tag = 'input window, operand 0, single buffered']
    #allocation3 [shape = 's32[1]{0}', space=sflag, size = 0x4, scoped, tag = 'scoped memory for tpu_custom_call.1']
    #allocation4 [shape = 'u8[24576]{0}', space=vmem, size = 0x6000, scoped, tag = 'input window, operand 1, single buffered']
    #allocation5 [shape = 's32[1]{0}', space=sflag, size = 0x4, scoped, tag = 'scoped memory for tpu_custom_call.1']
    #allocation6 [shape = 'u8[65536]{0}', space=vmem, size = 0x10000, scoped, tag = 'input window, operand 2, single buffered']
    %11 = vsyncpa [#allocation3], 0
    %12 = vsyncpa [#allocation5], 0
    // Predicated region
    $region2: #{tpu_custom_call.1} parent=1 // pred_check
      _
    $region3: #{tpu_custom_call.1} parent=1 // pred_check_branch
      %14 = sbr.rel (0) target = $region5
    $region4: #{tpu_custom_call.1} parent=1 // pred_region
      %s16 = ssub.s32 128, 128
      %17 = vsyncadd [#allocation3], %s16
      %s19 = sshll.u32 [#allocation2], 4
      %s20 = int_to_ptr.vmem [resolvable:$true] %s19
      %22 = dma.hbm_to_vmem [thread:$0]  %s0, 128, %s20, [#allocation3]
    $region5: #{tpu_custom_call.1} parent=1 // pred_fallthru
      _
    // Predicated region
    $region6: #{tpu_custom_call.1} parent=1 // pred_check
      _
    $region7: #{tpu_custom_call.1} parent=1 // pred_check_branch
      %24 = sbr.rel (0) target = $region9
    $region8: #{tpu_custom_call.1} parent=1 // pred_region
      %s26 = ssub.s32 768, 768
      %27 = vsyncadd [#allocation5], %s26
      %s28 = sshll.u32 [#allocation4], 4
      %s29 = int_to_ptr.vmem [resolvable:$true] %s28
      %34 = dma.hbm_to_vmem [thread:$0]  %s1, 768, %s29, [#allocation5], 128, 128, 8
    $region9: #{tpu_custom_call.1} parent=1 // pred_fallthru
      _
    // Predicated region
    $region10: #{tpu_custom_call.1} parent=1 // pred_check
      _
    $region11: #{tpu_custom_call.1} parent=1 // pred_check_branch
      %36 = sbr.rel (0) target = $region13
    $region12: #{tpu_custom_call.1} parent=1 // pred_region
      %s38 = ssub.s32 2048, 2048
      %39 = vsyncadd [#allocation5], %s38
      %s40 = sshll.u32 [#allocation6], 4
      %s41 = int_to_ptr.vmem [resolvable:$true] %s40
      %46 = dma.hbm_to_vmem [thread:$0]  %s2, 2048, %s41, [#allocation5], 256, 256, 16
    $region13: #{tpu_custom_call.1} parent=1 // pred_fallthru
      _
    // Predicated region
    $region14: #{tpu_custom_call.1} parent=1 // pred_check
      _
    $region15: #{tpu_custom_call.1} parent=1 // pred_check_branch
      %48 = sbr.rel (0) target = $region17
    $region16: #{tpu_custom_call.1} parent=1 // pred_region
      _
    $region17: #{tpu_custom_call.1} parent=1 // pred_fallthru
      _
    // Predicated region
    $region18: #{tpu_custom_call.1} parent=1 // pred_check
      _
    $region19: #{tpu_custom_call.1} parent=1 // pred_check_branch
      %50 = sbr.rel (0) target = $region21
    $region20: #{tpu_custom_call.1} parent=1 // pred_region
      _
    $region21: #{tpu_custom_call.1} parent=1 // pred_fallthru
      _
    // Predicated region
    $region22: #{tpu_custom_call.1} parent=1 // pred_check
      _
    $region23: #{tpu_custom_call.1} parent=1 // pred_check_branch
      %52 = sbr.rel (0) target = $region25
    $region24: #{tpu_custom_call.1} parent=1 // pred_region
      _
    $region25: #{tpu_custom_call.1} parent=1 // pred_fallthru
      _
    // Predicated region
    $region26: #{tpu_custom_call.1} parent=1 // pred_check
      _
    $region27: #{tpu_custom_call.1} parent=1 // pred_check_branch
      %54 = sbr.rel (0) target = $region29
    $region28: #{tpu_custom_call.1} parent=1 // pred_region
      %55 = dma.done [#allocation3], 128
    $region29: #{tpu_custom_call.1} parent=1 // pred_fallthru
      _
    // Predicated region
    $region30: #{tpu_custom_call.1} parent=1 // pred_check
      _
    $region31: #{tpu_custom_call.1} parent=1 // pred_check_branch
      %57 = sbr.rel (0) target = $region33
    $region32: #{tpu_custom_call.1} parent=1 // pred_region
      %58 = dma.done [#allocation5], 768
    $region33: #{tpu_custom_call.1} parent=1 // pred_fallthru
      _
    // Predicated region
    $region34: #{tpu_custom_call.1} parent=1 // pred_check
      _
    $region35: #{tpu_custom_call.1} parent=1 // pred_check_branch
      %60 = sbr.rel (0) target = $region37
    $region36: #{tpu_custom_call.1} parent=1 // pred_region
      %61 = dma.done [#allocation5], 2048
    $region37: #{tpu_custom_call.1} parent=1 // pred_fallthru
      _
    %v62 = vld [vmem:[#allocation2] sm:$0xff]
    %v63 = vld [vmem:[#allocation4] sm:$0xff]
    %v64 = vld [vmem:[#allocation4 + $0x8] sm:$0xff]
    %v65 = vld [vmem:[#allocation4 + $0x10] sm:$0xff]
    %v66 = vld [vmem:[#allocation4 + $0x18] sm:$0xff]
    %v67 = vld [vmem:[#allocation4 + $0x20] sm:$0xff]
    %v68 = vld [vmem:[#allocation4 + $0x28] sm:$0x1]
    %vm69 = vcmask 334848
    %v71 = vsel %vm69, %v62, 0
    %vm73 = vcmask 1040384
    %v75 = vsel %vm73, %v68, 0
    %77 = vmatprep.subr.mxu0 0.0
    %78 = vmatpush1.msra.mxu0 0.0
    %79 = vmatprep.subr.mxu0 0.0
    %80 = vmatpush1.msra.mxu0 0.0
    %81 = vmatprep.subr.mxu0 0.0
    %82 = vmatpush1.msra.mxu0 0.0
    %83 = vmatprep.subr.mxu0 0.0
    %84 = vmatpush1.msra.mxu0 0.0
    %85 = vmatprep.subr.mxu0 0.0
    %86 = vmatpush1.msra.mxu0 0.0
    %87 = vmatprep.subr.mxu0 0.0
    %88 = vmatpush1.msra.mxu0 0.0
    %89 = vmatprep.subr.mxu0 0.0
    %90 = vmatpush1.msra.mxu0 0.0
    %91 = vmatprep.subr.mxu0 0.0
    %92 = vmatpush1.msra.mxu0 0.0
    %93 = vmatprep.subr.mxu0 0.0
    %94 = vmatpush1.msra.mxu0 0.0
    %95 = vmatprep.subr.mxu0 0.0
    %96 = vmatpush1.msra.mxu0 0.0
    %97 = vmatprep.subr.mxu0 0.0
    %98 = vmatpush1.msra.mxu0 %v75
    %99 = vmatprep.subr.mxu0 0.0
    %100 = vmatpush1.msra.mxu0 %v67
    %101 = vmatprep.subr.mxu0 0.0
    %102 = vmatpush1.msra.mxu0 %v66
    %103 = vmatprep.subr.mxu0 0.0
    %104 = vmatpush1.msra.mxu0 %v65
    %105 = vmatprep.subr.mxu0 0.0
    %106 = vmatpush1.msra.mxu0 %v64
    %107 = vmatprep.subr.mxu0 0.0
    %108 = vmatpush1.msra.mxu0 %v63
    %109 = vmatprep.subr.mxu0 0.0
    %110 = vmatpush2.msra.mxu0 0.0
    %111 = vmatprep.subr.mxu0 0.0
    %112 = vmatpush2.msra.mxu0 0.0
    %113 = vmatprep.subr.mxu0 0.0
    %114 = vmatpush2.msra.mxu0 0.0
    %115 = vmatprep.subr.mxu0 0.0
    %116 = vmatpush2.msra.mxu0 0.0
    %117 = vmatprep.subr.mxu0 0.0
    %118 = vmatpush2.msra.mxu0 0.0
    %119 = vmatprep.subr.mxu0 0.0
    %120 = vmatpush2.msra.mxu0 0.0
    %121 = vmatprep.subr.mxu0 0.0
    %122 = vmatpush2.msra.mxu0 0.0
    %123 = vmatprep.subr.mxu0 0.0
    %124 = vmatpush2.msra.mxu0 0.0
    %125 = vmatprep.subr.mxu0 0.0
    %126 = vmatpush2.msra.mxu0 0.0
    %127 = vmatprep.subr.mxu0 0.0
    %128 = vmatpush2.msra.mxu0 0.0
    %129 = vmatprep.subr.mxu0 0.0
    %130 = vmatpush2.msra.mxu0 0.0
    %131 = vmatprep.subr.mxu0 0.0
    %132 = vmatpush2.msra.mxu0 0.0
    %133 = vmatprep.subr.mxu0 0.0
    %134 = vmatpush2.msra.mxu0 0.0
    %135 = vmatprep.subr.mxu0 0.0
    %136 = vmatpush2.msra.mxu0 0.0
    %137 = vmatprep.subr.mxu0 0.0
    %138 = vmatpush2.msra.mxu0 0.0
    %139 = vmatprep.subr.mxu0 0.0
    %140 = vmatpush2.msra.mxu0 0.0
    %141 = vmatprep.mubr.f32.mxu0 0.0
    %142 = vmatmul.mubr.f32.gmra.mxu0 %v71
    %v143 = vpop.f32.mrf.mxu0
    %v144 = vadd.f32 0.0, %v143
    %v145 = vpop.f32.mrf.mxu0
    %146 = vdwg.mxu0
    %v147 = vmax.f32 %v144, 0.0
    %v148 = vld [vmem:[#allocation6] sm:$0xff]
    %v149 = vld [vmem:[#allocation6 + $0x8] sm:$0xff]
    %v150 = vld [vmem:[#allocation6 + $0x10] sm:$0xff]
    %v151 = vld [vmem:[#allocation6 + $0x18] sm:$0xff]
    %v152 = vld [vmem:[#allocation6 + $0x20] sm:$0xff]
    %v153 = vld [vmem:[#allocation6 + $0x28] sm:$0xff]
    %v154 = vld [vmem:[#allocation6 + $0x30] sm:$0xff]
    %v155 = vld [vmem:[#allocation6 + $0x38] sm:$0xff]
    %v156 = vld [vmem:[#allocation6 + $0x40] sm:$0xff]
    %v157 = vld [vmem:[#allocation6 + $0x48] sm:$0xff]
    %v158 = vld [vmem:[#allocation6 + $0x50] sm:$0xff]
    %v159 = vld [vmem:[#allocation6 + $0x58] sm:$0xff]
    %v160 = vld [vmem:[#allocation6 + $0x60] sm:$0xff]
    %v161 = vld [vmem:[#allocation6 + $0x68] sm:$0xff]
    %v162 = vld [vmem:[#allocation6 + $0x70] sm:$0xff]
    %v163 = vld [vmem:[#allocation6 + $0x78] sm:$0xff]
    %v164 = vld [vmem:[%s3] sm:$0x3]
    %v166 = vlaneseq
    %v167 = vshrl.u32 %v166, 7
    %v168 = vsub.s32 0, %v167
    %v169 = vrot.slane %v164, %v168
    %v170 = vlaneseq
    %v171 = vshrl.u32 %v170, 7
    %v172 = vsub.s32 1, %v171
    %v173 = vrot.slane %v164, %v172
    %vm176 = vcmask 523264
    %v178 = vsel %vm176, %v147, 0
    %180 = vmatprep.subr.mxu0 0.0
    %181 = vmatpush1.msra.mxu0 0.0
    %182 = vmatprep.subr.mxu0 0.0
    %183 = vmatpush1.msra.mxu0 0.0
    %184 = vmatprep.subr.mxu0 0.0
    %185 = vmatpush1.msra.mxu0 0.0
    %186 = vmatprep.subr.mxu0 0.0
    %187 = vmatpush1.msra.mxu0 0.0
    %188 = vmatprep.subr.mxu0 0.0
    %189 = vmatpush1.msra.mxu0 0.0
    %190 = vmatprep.subr.mxu0 0.0
    %191 = vmatpush1.msra.mxu0 0.0
    %192 = vmatprep.subr.mxu0 0.0
    %193 = vmatpush1.msra.mxu0 0.0
    %194 = vmatprep.subr.mxu0 0.0
    %195 = vmatpush1.msra.mxu0 0.0
    %196 = vmatprep.subr.mxu0 %v163
    %197 = vmatpush1.msra.mxu0 %v162
    %198 = vmatprep.subr.mxu0 %v161
    %199 = vmatpush1.msra.mxu0 %v160
    %200 = vmatprep.subr.mxu0 %v159
    %201 = vmatpush1.msra.mxu0 %v158
    %202 = vmatprep.subr.mxu0 %v157
    %203 = vmatpush1.msra.mxu0 %v156
    %204 = vmatprep.subr.mxu0 %v155
    %205 = vmatpush1.msra.mxu0 %v154
    %206 = vmatprep.subr.mxu0 %v153
    %207 = vmatpush1.msra.mxu0 %v152
    %208 = vmatprep.subr.mxu0 %v151
    %209 = vmatpush1.msra.mxu0 %v150
    %210 = vmatprep.subr.mxu0 %v149
    %211 = vmatpush1.msra.mxu0 %v148
    %212 = vmatprep.subr.mxu0 0.0
    %213 = vmatpush2.msra.mxu0 0.0
    %214 = vmatprep.subr.mxu0 0.0
    %215 = vmatpush2.msra.mxu0 0.0
    %216 = vmatprep.subr.mxu0 0.0
    %217 = vmatpush2.msra.mxu0 0.0
    %218 = vmatprep.subr.mxu0 0.0
    %219 = vmatpush2.msra.mxu0 0.0
    %220 = vmatprep.subr.mxu0 0.0
    %221 = vmatpush2.msra.mxu0 0.0
    %222 = vmatprep.subr.mxu0 0.0
    %223 = vmatpush2.msra.mxu0 0.0
    %224 = vmatprep.subr.mxu0 0.0
    %225 = vmatpush2.msra.mxu0 0.0
    %226 = vmatprep.subr.mxu0 0.0
    %227 = vmatpush2.msra.mxu0 0.0
    %228 = vmatprep.subr.mxu0 0.0
    %229 = vmatpush2.msra.mxu0 0.0
    %230 = vmatprep.subr.mxu0 0.0
    %231 = vmatpush2.msra.mxu0 0.0
    %232 = vmatprep.subr.mxu0 0.0
    %233 = vmatpush2.msra.mxu0 0.0
    %234 = vmatprep.subr.mxu0 0.0
    %235 = vmatpush2.msra.mxu0 0.0
    %236 = vmatprep.subr.mxu0 0.0
    %237 = vmatpush2.msra.mxu0 0.0
    %238 = vmatprep.subr.mxu0 0.0
    %239 = vmatpush2.msra.mxu0 0.0
    %240 = vmatprep.subr.mxu0 0.0
    %241 = vmatpush2.msra.mxu0 0.0
    %242 = vmatprep.subr.mxu0 0.0
    %243 = vmatpush2.msra.mxu0 0.0
    %244 = vmatprep.mubr.f32.mxu0 0.0
    %245 = vmatmul.mubr.f32.gmra.mxu0 %v178
    %v246 = vpop.f32.mrf.mxu0
    %v247 = vadd.f32 %v169, %v246
    %v248 = vpop.f32.mrf.mxu0
    %v249 = vadd.f32 %v173, %v248
    %250 = vdwg.mxu0
    %v251 = vmax.f32 %v247, 0.0
    %v252 = vmax.f32 %v249, 0.0
    %v253 = vld [vmem:[%s4] sm:$0x3]
    %v255 = vlaneseq
    %v256 = vshrl.u32 %v255, 7
    %v257 = vsub.s32 0, %v256
    %v258 = vrot.slane %v253, %v257
    %v259 = vlaneseq
    %v260 = vshrl.u32 %v259, 7
    %v261 = vsub.s32 1, %v260
    %v262 = vrot.slane %v253, %v261
    %v265 = vmul.f32 %v251, %v258
    %v266 = vmul.f32 %v252, %v262
    %267 = vadd.xlane.f32.xlu0 %v265
    %v268 = vpop.xlane.xlu0 %267
    %269 = vadd.xlane.f32.xlu0 %v266
    %v270 = vpop.xlane.xlu0 %269
    %vm271 = vcmask 7168
    %v272 = vsel %vm271, %v268, %v270
    %v273 = vld [vmem:[%s5] sm:$0x1]
    %v275 = vlaneseq
    %v276 = vshrl.u32 %v275, 7
    %v277 = vsub.s32 0, %v276
    %v278 = vrot.slane %v273, %v277
    %v280 = vadd.f32 %v272, %v278
    %vm281 = vcmask 15360
    %282 = vst.msk [vmem:[%s6] sm:$0xff] %vm281, %v280
    // Predicated region
    $region38: #{tpu_custom_call.1} parent=1 // pred_check
      _
    $region39: #{tpu_custom_call.1} parent=1 // pred_check_branch
      %284 = sbr.rel (0) target = $region41
    $region40: #{tpu_custom_call.1} parent=1 // pred_region
      _
    $region41: #{tpu_custom_call.1} parent=1 // pred_fallthru
      _
    // Predicated region
    $region42: #{tpu_custom_call.1} parent=1 // pred_check
      _
    $region43: #{tpu_custom_call.1} parent=1 // pred_check_branch
      %286 = sbr.rel (0) target = $region45
    $region44: #{tpu_custom_call.1} parent=1 // pred_region
      _
    $region45: #{tpu_custom_call.1} parent=1 // pred_fallthru
      _
    %287 = vsyncpa [#allocation3], 1
    %288 = vsyncpa [#allocation5], 1

</llo_original>
